<compile_context>
chip_gen: v7x
topology: tpu7x:2x2x1
jax: 0.10.0
libtpu: 0.0.40
codegen_flags: <defaults>
</compile_context>

<pallas_src>
import jax
import jax.numpy as jnp
from jax.experimental import pallas as pl
from jax.experimental.pallas import tpu as pltpu


def conv3x3_gemm_kernel(xt_ref, wt_ref, b_ref, o_ref):
    # xt_ref: (1, K, TM)    compute-dtype im2col columns for TM pixels
    # wt_ref: (Cout, K)     conv weights, tap-major columns (resident)
    # b_ref : (Cout, 1)     f32 bias (resident)
    # o_ref : (1, Cout, TM) lane-dense output tile (TM % 128 == 0)
    acc = jnp.dot(wt_ref[...], xt_ref[0], preferred_element_type=jnp.float32)
    o_ref[0] = jnp.maximum(acc + b_ref[...], 0.0).astype(o_ref.dtype)


def _choose_tile_cols(m_img, cout, out_bytes, max_tile_cols=None,
                      vmem_budget_bytes=16 * 1024 * 1024):
    """Largest 128-multiple pixel-tile width that fits the VMEM budget."""
    # Per-column bytes: 2x-buffered bf16 input block (K=27 padded to 32
    # sublanes), 2x-buffered output block, plus the live f32 accumulator.
    per_col = 2 * 32 * 2 + 2 * cout * out_bytes + cout * 4
    cap = max(128, (vmem_budget_bytes // per_col) // 128 * 128)
    if max_tile_cols is not None:
        cap = min(cap, max(128, (max_tile_cols // 128) * 128))
    m_rounded = pl.cdiv(m_img, 128) * 128
    return min(cap, m_rounded)


def style_sam_forward(x_nchw, weight, bias, *, out_dtype=jnp.float32,
                      compute_dtype=jnp.bfloat16, max_tile_cols=None,
                      core_parallel=False):
    """x_nchw: (N, 3, H, W) f32; weight: (64, 3, 3, 3) OIHW; bias: (64,)."""
    N, Cin, H, W = x_nchw.shape
    Cout = weight.shape[0]
    K = 9 * Cin
    M_img = H * W

    # --- im2col, built straight from NCHW; cast FIRST so all intermediates
    # XLA materializes are already in the (narrow) compute dtype.
    # TODO(synk): fuse im2col in-kernel (row-halo BlockSpec + pltpu.roll lane
    # shifts) to drop the materialized slab entirely (~25-35% fewer HBM bytes).
    x_c = x_nchw.astype(compute_dtype)
    x_pad = jnp.pad(x_c, ((0, 0), (0, 0), (1, 1), (1, 1)))
    taps = [x_pad[:, :, dy:dy + H, dx:dx + W]          # each (N, Cin, H, W)
            for dy in range(3) for dx in range(3)]
    # (N, 9, Cin, H, W) -> (N, K, H*W): row index = tap*Cin + ci (tap-major),
    # matching the (Cout, ky, kx, cin) weight-column layout below.
    x_cols = jnp.stack(taps, axis=1).reshape(N, K, M_img)

    out_bytes = jnp.dtype(out_dtype).itemsize
    TM = _choose_tile_cols(M_img, Cout, out_bytes, max_tile_cols=max_tile_cols)
    n_tiles = pl.cdiv(M_img, TM)
    Mp = n_tiles * TM
    if Mp != M_img:
        # Zero-pad the pixel axis; the padded columns are computed (cheap) and
        # sliced off below -- never a single full-M tile, never a VMEM OOM.
        x_cols = jnp.pad(x_cols, ((0, 0), (0, 0), (0, Mp - M_img)))

    # OIHW (Cout, Cin, 3, 3) -> (Cout, 9*Cin), tap-major columns.
    w_t = jnp.transpose(weight, (0, 2, 3, 1)).reshape(Cout, K).astype(compute_dtype)
    b_col = bias.reshape(Cout, 1).astype(jnp.float32)

    # CORE_PARALLEL on the tile axis guarantees 2-TC sharding on v7x; plain
    # "parallel" is the safe default for single-TensorCore chips (v5e/v6e).
    dims = ("parallel", pltpu.CORE_PARALLEL if core_parallel else "parallel")

    out = pl.pallas_call(
        conv3x3_gemm_kernel,
        out_shape=jax.ShapeDtypeStruct((N, Cout, Mp), out_dtype),
        grid_spec=pltpu.PrefetchScalarGridSpec(
            num_scalar_prefetch=0,
            grid=(N, n_tiles),
            in_specs=[
                pl.BlockSpec((1, K, TM), lambda n, i: (n, 0, i)),   # im2col cols
                pl.BlockSpec((Cout, K), lambda n, i: (0, 0)),       # weights
                pl.BlockSpec((Cout, 1), lambda n, i: (0, 0)),       # bias
            ],
            out_specs=pl.BlockSpec((1, Cout, TM), lambda n, i: (n, 0, i)),
        ),
        compiler_params=pltpu.CompilerParams(
            dimension_semantics=dims,
            vmem_limit_bytes=48 * 1024 * 1024,
        ),
    )(x_cols, w_t, b_col)

    if Mp != M_img:
        out = out[:, :, :M_img]
    # (N, Cout, H*W) -> (N, Cout, H, W): contiguous reshape, no transpose.
    return out.reshape(N, Cout, H, W)


def _reference_forward(x_nchw, weight, bias):
    # Pure-JAX reference (XLA conv, f32) for correctness checking.
    y = jax.lax.conv_general_dilated(
        x_nchw, weight, window_strides=(1, 1), padding=((1, 1), (1, 1)),
        dimension_numbers=("NCHW", "OIHW", "NCHW"))
    y = y + bias.reshape(1, -1, 1, 1)
    return jnp.maximum(y, 0.0)


if __name__ == "__main__":
    key = jax.random.PRNGKey(0)
    kx, kw, kb, kx2 = jax.random.split(key, 4)

    N, Cin, H, W, Cout = 2, 3, 16, 16, 64
    x = jax.random.normal(kx, (N, Cin, H, W), dtype=jnp.float32)

    # Deterministic parameter init (PyTorch-like uniform fan-in scaling).
    fan_in = Cin * 3 * 3
    bound = 1.0 / (fan_in ** 0.5)
    weight = jax.random.uniform(kw, (Cout, Cin, 3, 3), dtype=jnp.float32,
                                minval=-bound, maxval=bound)
    bias = jax.random.uniform(kb, (Cout,), dtype=jnp.float32,
                              minval=-bound, maxval=bound)

    fwd = jax.jit(style_sam_forward,
                  static_argnames=("out_dtype", "compute_dtype",
                                   "max_tile_cols", "core_parallel"))

    # 1) Default path (bf16 GEMM inputs, f32 output, single tile per image).
    ref = _reference_forward(x, weight, bias)
    out = jax.block_until_ready(fwd(x, weight, bias))
    assert out.shape == (N, Cout, H, W)
    assert jnp.allclose(out, ref, atol=5e-2, rtol=5e-2)

    # 2) Forced small tiles: exercises the multi-step pipelined 2-D grid path.
    out_tiled = jax.block_until_ready(fwd(x, weight, bias, max_tile_cols=128))
    assert jnp.allclose(out_tiled, ref, atol=5e-2, rtol=5e-2)

    # 3) Odd spatial size + small tiles: exercises the pixel-axis padding path.
    H2 = W2 = 15
    x_odd = jax.random.normal(kx2, (N, Cin, H2, W2), dtype=jnp.float32)
    ref_odd = _reference_forward(x_odd, weight, bias)
    out_odd = jax.block_until_ready(fwd(x_odd, weight, bias, max_tile_cols=128))
    assert out_odd.shape == (N, Cout, H2, W2)
    assert jnp.allclose(out_odd, ref_odd, atol=5e-2, rtol=5e-2)

    # 4) f32 GEMM inputs (PyTorch-parity path) -> tight tolerance.
    out_f32 = jax.block_until_ready(
        fwd(x, weight, bias, compute_dtype=jnp.float32))
    assert jnp.allclose(out_f32, ref, atol=1e-5, rtol=1e-5)

    # 5) bf16 output store (bandwidth-saving flag).
    out_bf16 = jax.block_until_ready(
        fwd(x, weight, bias, out_dtype=jnp.bfloat16))
    assert out_bf16.dtype == jnp.bfloat16
    assert jnp.allclose(out_bf16.astype(jnp.float32), ref, atol=5e-2, rtol=5e-2)

    print("KERNEL_OK")
</pallas_src>

<mosaic_0001>
module attributes {stable_mosaic.version = 11 : i64} {
  func.func @conv3x3_gemm_kernel(%arg0: i32, %arg1: i32, %arg2: memref<1x27x256xbf16, #tpu.memory_space<vmem>>, %arg3: memref<64x27xbf16, #tpu.memory_space<vmem>>, %arg4: memref<64x1xf32, #tpu.memory_space<vmem>>, %arg5: memref<1x64x256xf32, #tpu.memory_space<vmem>>) attributes {dimension_semantics = [#tpu.dimension_semantics<parallel>, #tpu.dimension_semantics<parallel>], iteration_bounds = array<i64: 2, 1>, scalar_prefetch = 0 : i64, scratch_operands = 0 : i64, tpu.core_type = #tpu.core_type<tc>, window_params = [{transform_indices = @transform_0, window_bounds = array<i64: 1, 27, 256>}, {pipeline_mode = #tpu.pipeline_mode<synchronous>, transform_indices = @transform_1, window_bounds = array<i64: 64, 27>}, {pipeline_mode = #tpu.pipeline_mode<synchronous>, transform_indices = @transform_2, window_bounds = array<i64: 64, 1>}, {transform_indices = @transform_3, window_bounds = array<i64: 1, 64, 256>}]} {
    %c0 = arith.constant 0 : index
    %c0_0 = arith.constant 0 : index
    %0 = vector.load %arg3[%c0, %c0_0] : memref<64x27xbf16, #tpu.memory_space<vmem>>, vector<64x27xbf16>
    %c0_1 = arith.constant 0 : index
    %c0_2 = arith.constant 0 : index
    %c0_3 = arith.constant 0 : index
    %1 = vector.load %arg2[%c0_1, %c0_2, %c0_3] : memref<1x27x256xbf16, #tpu.memory_space<vmem>>, vector<1x27x256xbf16>
    %2 = vector.shape_cast %1 : vector<1x27x256xbf16> to vector<27x256xbf16>
    %cst = arith.constant dense<0.000000e+00> : vector<64x256xf32>
    %3 = tpu.matmul %0, %2, %cst {dimension_numbers = #tpu.dot_dimension_numbers<[1], [0], [0], [1], [0, 0, 1, 1], [], []>} : vector<64x27xbf16>, vector<27x256xbf16>, vector<64x256xf32> -> vector<64x256xf32>
    %c0_4 = arith.constant 0 : index
    %c0_5 = arith.constant 0 : index
    %4 = vector.load %arg4[%c0_4, %c0_5] : memref<64x1xf32, #tpu.memory_space<vmem>>, vector<64x1xf32>
    %5 = vector.broadcast %4 : vector<64x1xf32> to vector<64x256xf32>
    %6 = arith.addf %3, %5 : vector<64x256xf32>
    %cst_6 = arith.constant 0.000000e+00 : f32
    %7 = vector.broadcast %cst_6 : f32 to vector<64x256xf32>
    %8 = arith.maximumf %6, %7 : vector<64x256xf32>
    %c0_7 = arith.constant 0 : index
    %c0_8 = arith.constant 0 : index
    %c0_9 = arith.constant 0 : index
    %9 = vector.load %arg5[%c0_7, %c0_8, %c0_9] : memref<1x64x256xf32, #tpu.memory_space<vmem>>, vector<1x64x256xf32>
    %10 = vector.shape_cast %9 : vector<1x64x256xf32> to vector<64x256xf32>
    %11 = vector.shape_cast %8 : vector<64x256xf32> to vector<1x64x256xf32>
    tpu.vector_store %arg5[%c0_7, %c0_8, %c0_9], %11 {strides = array<i32>} : memref<1x64x256xf32, #tpu.memory_space<vmem>>, vector<1x64x256xf32>,
    return
  }
  func.func @transform_0(%arg0: i32, %arg1: i32) -> (i32, i32, i32) {
    %c0_i32 = arith.constant 0 : i32
    %c0_i32_0 = arith.constant 0 : i32
    return %arg0, %c0_i32, %arg1 : i32, i32, i32
  }
  func.func @transform_1(%arg0: i32, %arg1: i32) -> (i32, i32) {
    %c0_i32 = arith.constant 0 : i32
    %c0_i32_0 = arith.constant 0 : i32
    %c0_i32_1 = arith.constant 0 : i32
    return %c0_i32, %c0_i32_0 : i32, i32
  }
  func.func @transform_2(%arg0: i32, %arg1: i32) -> (i32, i32) {
    %c0_i32 = arith.constant 0 : i32
    %c0_i32_0 = arith.constant 0 : i32
    %c0_i32_1 = arith.constant 0 : i32
    return %c0_i32, %c0_i32_0 : i32, i32
  }
  func.func @transform_3(%arg0: i32, %arg1: i32) -> (i32, i32, i32) {
    %c0_i32 = arith.constant 0 : i32
    %c0_i32_0 = arith.constant 0 : i32
    return %arg0, %c0_i32, %arg1 : i32, i32, i32
  }
}

</mosaic_0001>

<llo_original>
// kernel: style_sam_forward.1
$region0: #{style_sam_forward.1}
  #allocation0 [shape = 'u32[]', space=smem, size = 0x4, offset = 0x4, fixed_abs, tag = 'smem constant byte address 0x4 - core index']
  #allocation1 [shape = 'u32[144,128]{1,0:T(1,128)}', space=vmem, size = 0x12000, scoped, tag = 'internal scratch']
  %s0 = inlined_call_operand.vmem [shape: bf16[2,27,256], index: 0, kind: input, shape index: {}]
  %s1 = inlined_call_operand.vmem [shape: bf16[64,27], index: 1, kind: input, shape index: {}]
  %s2 = inlined_call_operand.vmem [shape: f32[64,1], index: 2, kind: input, shape index: {}]
  %s3 = inlined_call_operand.vmem [shape: f32[2,64,256], index: 3, kind: output, shape index: {}]
  %s4 = sld [smem:[#allocation0]]
  $region45: #{style_sam_forward.1} parent=0
    _
  %s6 = ssub.s32 1, %s4
  %s7 = scalar_select 0, %s6, %s4
  loop: start=0, step=1, limit=4
  $region2: #{style_sam_forward.1} parent=0 // loop_pre_header
    _
  $region3: #{style_sam_forward.1} parent=0 // loop_header
    %s9 = sphi 0, %s13
    %p10 = scmp.ge.s32.totalorder %s9, 4
    %s16 = sphi 0, %s28
    %s17 = sphi 0, %s24
    %s18 = sphi 0, %s16
    %s19 = sphi 0, %s17
    %s20 = sphi 0, %s18
    %s21 = sphi 0, %s19
    %s33 = sphi 0, %s35
    %s36 = sphi 0, %s33
    %s37 = sphi 0, %s36
    %s53 = sphi 0, %s37
    %s57 = sphi 0, %s57
    %s59 = sphi 0, %s57
    %s60 = sphi 0, %s59
    %s74 = sphi 0, %s60
    %s78 = sphi 0, %s78
    %s80 = sphi 0, %s78
    %s81 = sphi 0, %s80
    %s95 = sphi 0, %s81
    %s103 = sphi 0, %s105
    %s106 = sphi 0, %s103
    %s107 = sphi 0, %s106
    %s123 = sphi 0, %s107
  $region4: #{style_sam_forward.1} parent=0 // loop_header_branch
    %12 = sbr.rel (%p10) target = $region8
  $region5: #{style_sam_forward.1} parent=0 // loop_body
    %s14 = ssub.s32 %s9, 1
    %s15 = ssub.s32 %s9, 2
    %s22 = sadd.s32 1, %s17
    %p23 = scmp.ge.s32.totalorder %s22, 1
    %s24 = scalar_select %p23, 0, %s22
    %s25 = sadd.s32 1, %s16
    %s26 = scalar_select %p23, %s25, %s16
    %p27 = scmp.ge.s32.totalorder %s26, 2
    %s28 = scalar_select %p27, 0, %s26
    %s29 = ssub.s32 %s16, %s28
    %s30 = ssub.s32 %s17, %s24
    %s31 = sor.u32 %s29, %s30
    %p32 = scmp.eq.s32.totalorder %s31, 0
    %s34 = sadd.s32 %s33, 1
    %s35 = scalar_select %p32, %s33, %s34
    %p38 = pneg %p32
    %p39 = scmp.eq.s32.totalorder %s9, 1
    %p40 = por %p38, %p39
    %p41 = scmp.ne.s32.totalorder %s33, %s36
    %p42 = scmp.eq.s32.totalorder %s9, 0
    %p43 = por %p41, %p42
    %p44 = scmp.ne.s32.totalorder %s33, %s36
    %p45 = scmp.eq.s32.totalorder %s14, 1
    %p46 = por %p44, %p45
    %p47 = scmp.ne.s32.totalorder %s36, %s37
    %p48 = scmp.eq.s32.totalorder %s14, 0
    %p49 = por %p47, %p48
    %p50 = scmp.ne.s32.totalorder %s36, %s37
    %p51 = scmp.eq.s32.totalorder %s15, 1
    %p52 = por %p50, %p51
    %p54 = scmp.ne.s32.totalorder %s37, %s53
    %p55 = scmp.eq.s32.totalorder %s15, 0
    %p56 = por %p54, %p55
    %s58 = sadd.s32 %s57, 1
    %p61 = scmp.eq.s32.totalorder %s9, 1
    %p62 = scmp.ne.s32.totalorder %s57, %s59
    %p63 = scmp.eq.s32.totalorder %s9, 0
    %p64 = por %p62, %p63
    %p65 = scmp.ne.s32.totalorder %s57, %s59
    %p66 = scmp.eq.s32.totalorder %s14, 1
    %p67 = por %p65, %p66
    %p68 = scmp.ne.s32.totalorder %s59, %s60
    %p69 = scmp.eq.s32.totalorder %s14, 0
    %p70 = por %p68, %p69
    %p71 = scmp.ne.s32.totalorder %s59, %s60
    %p72 = scmp.eq.s32.totalorder %s15, 1
    %p73 = por %p71, %p72
    %p75 = scmp.ne.s32.totalorder %s60, %s74
    %p76 = scmp.eq.s32.totalorder %s15, 0
    %p77 = por %p75, %p76
    %s79 = sadd.s32 %s78, 1
    %p82 = scmp.eq.s32.totalorder %s9, 1
    %p83 = scmp.ne.s32.totalorder %s78, %s80
    %p84 = scmp.eq.s32.totalorder %s9, 0
    %p85 = por %p83, %p84
    %p86 = scmp.ne.s32.totalorder %s78, %s80
    %p87 = scmp.eq.s32.totalorder %s14, 1
    %p88 = por %p86, %p87
    %p89 = scmp.ne.s32.totalorder %s80, %s81
    %p90 = scmp.eq.s32.totalorder %s14, 0
    %p91 = por %p89, %p90
    %p92 = scmp.ne.s32.totalorder %s80, %s81
    %p93 = scmp.eq.s32.totalorder %s15, 1
    %p94 = por %p92, %p93
    %p96 = scmp.ne.s32.totalorder %s81, %s95
    %p97 = scmp.eq.s32.totalorder %s15, 0
    %p98 = por %p96, %p97
    %s99 = ssub.s32 %s16, %s28
    %s100 = ssub.s32 %s17, %s24
    %s101 = sor.u32 %s99, %s100
    %p102 = scmp.eq.s32.totalorder %s101, 0
    %s104 = sadd.s32 %s103, 1
    %s105 = scalar_select %p102, %s103, %s104
    %p108 = pneg %p102
    %p109 = scmp.eq.s32.totalorder %s9, 1
    %p110 = por %p108, %p109
    %p111 = scmp.ne.s32.totalorder %s103, %s106
    %p112 = scmp.eq.s32.totalorder %s9, 0
    %p113 = por %p111, %p112
    %p114 = scmp.ne.s32.totalorder %s103, %s106
    %p115 = scmp.eq.s32.totalorder %s14, 1
    %p116 = por %p114, %p115
    %p117 = scmp.ne.s32.totalorder %s106, %s107
    %p118 = scmp.eq.s32.totalorder %s14, 0
    %p119 = por %p117, %p118
    %p120 = scmp.ne.s32.totalorder %s106, %s107
    %p121 = scmp.eq.s32.totalorder %s15, 1
    %p122 = por %p120, %p121
    %p124 = scmp.ne.s32.totalorder %s107, %s123
    %p125 = scmp.eq.s32.totalorder %s15, 0
    %p126 = por %p124, %p125
    %p127 = scmp.le.s32.totalorder 1, %s9
    %p128 = scmp.lt.s32.totalorder %s9, 3
    %p129 = pnand %p127, %p128
    %p130 = pneg %p129
    // Predicated region
    $region9: #{style_sam_forward.1} parent=5 // pred_check
      _
    $region10: #{style_sam_forward.1} parent=5 // pred_check_branch
      %132 = sbr.rel (%p129) target = $region12
    $region11: #{style_sam_forward.1} parent=5 // pred_region
      %s133 = ssub.s32 %s9, 1
      // Predicated region
      $region13: #{style_sam_forward.1} parent=11 // pred_check
        %p134 = pneg %p70
      $region14: #{style_sam_forward.1} parent=11 // pred_check_branch
        %136 = sbr.rel (%p134) target = $region16
      $region15: #{style_sam_forward.1} parent=11 // pred_region
        _
      $region16: #{style_sam_forward.1} parent=11 // pred_fallthru
        _
      // Predicated region
      $region17: #{style_sam_forward.1} parent=11 // pred_check
        %p137 = pneg %p91
      $region18: #{style_sam_forward.1} parent=11 // pred_check_branch
        %139 = sbr.rel (%p137) target = $region20
      $region19: #{style_sam_forward.1} parent=11 // pred_region
        _
      $region20: #{style_sam_forward.1} parent=11 // pred_fallthru
        _
    $region12: #{style_sam_forward.1} parent=5 // pred_fallthru
      _
    %p140 = scmp.lt.s32.totalorder %s9, 2
    // Predicated region
    $region21: #{style_sam_forward.1} parent=5 // pred_check
      %p141 = pneg %p140
    $region22: #{style_sam_forward.1} parent=5 // pred_check_branch
      %143 = sbr.rel (%p141) target = $region24
    $region23: #{style_sam_forward.1} parent=5 // pred_region
      // Predicated region
      $region25: #{style_sam_forward.1} parent=23 // pred_check
        %p144 = pneg %p43
      $region26: #{style_sam_forward.1} parent=23 // pred_check_branch
        %146 = sbr.rel (%p144) target = $region28
      $region27: #{style_sam_forward.1} parent=23 // pred_region
        %s147 = smul.u32 2, %s17
        %p148 = scmp.lt.s32.totalorder %s16, 1
        %s149 = scalar_select %p148, %s16, 1
        %p150 = scmp.lt.s32.totalorder %s147, 1
        %s151 = scalar_select %p150, %s147, 1
        %s152 = smul.addr %s149, 8
        %s153 = sadd.s32 %s151, %s152
        %s154 = smul.addr %s153, 4
        %s155 = scalar_lea.vmem %s0, %s154
        %s156 = smul.u32 2, %s17
      $region28: #{style_sam_forward.1} parent=23 // pred_fallthru
        _
    $region24: #{style_sam_forward.1} parent=5 // pred_fallthru
      _
    %p157 = scmp.le.s32.totalorder 1, %s9
    %p158 = scmp.lt.s32.totalorder %s9, 3
    %p159 = pnand %p157, %p158
    %p160 = pneg %p159
    // Predicated region
    $region29: #{style_sam_forward.1} parent=5 // pred_check
      _
    $region30: #{style_sam_forward.1} parent=5 // pred_check_branch
      %162 = sbr.rel (%p159) target = $region32
    $region31: #{style_sam_forward.1} parent=5 // pred_region
      %s163 = ssub.s32 %s9, 1
      %s164 = smul.u32 2, %s19
      %p165 = scmp.lt.s32.totalorder %s18, 1
      %s166 = scalar_select %p165, %s18, 1
      %p167 = scmp.lt.s32.totalorder %s164, 1
      %s168 = scalar_select %p167, %s164, 1
      %s169 = smul.addr %s166, 8
      %s170 = sadd.s32 %s168, %s169
      %s171 = smul.addr %s170, 4
      %s172 = scalar_lea.vmem %s0, %s171
      %p173 = pneg %p49
      %p174 = pneg %p46
      %p175 = pneg %p70
      %p176 = pneg %p67
      %p177 = pneg %p91
      %p178 = pneg %p88
      %p179 = pneg %p119
      %p180 = pneg %p116
      %s181 = smul.u32 2, %s19
      %p182 = scmp.lt.s32.totalorder %s18, 1
      %s183 = scalar_select %p182, %s18, 1
      %p184 = scmp.lt.s32.totalorder %s181, 1
      %s185 = scalar_select %p184, %s181, 1
      %s186 = smul.addr %s183, 16
      %s187 = sadd.s32 %s185, %s186
      %s188 = smul.addr %s187, 8
      %s189 = scalar_lea.vmem %s3, %s188
      %s190 = smul.u32 2, %s19
      %p191 = scmp.lt.s32.totalorder %s18, 1
      %s192 = scalar_select %p191, %s18, 1
      %p193 = scmp.lt.s32.totalorder %s190, 1
      %s194 = scalar_select %p193, %s190, 1
      %s195 = smul.addr %s192, 8
      %s196 = sadd.s32 %s194, %s195
      %s197 = smul.addr %s196, 4
      %s198 = scalar_lea.vmem %s0, %s197
      %s199 = smul.u32 2, %s19
      %s200 = smul.u32 2, %s19
      %p201 = scmp.lt.s32.totalorder %s18, 1
      %s202 = scalar_select %p201, %s18, 1
      %p203 = scmp.lt.s32.totalorder %s200, 1
      %s204 = scalar_select %p203, %s200, 1
      %s205 = smul.addr %s202, 16
      %s206 = sadd.s32 %s204, %s205
      %s207 = smul.addr %s206, 8
      %s208 = scalar_lea.vmem %s3, %s207
      %s209 = smul.u32 2, %s19
      %v211 = vld [vmem:[%s1] sm:$0xf]
      %v212 = vld [vmem:[%s1 + $0x4] sm:$0xf]
      %v213 = vld [vmem:[%s1 + $0x8] sm:$0xf]
      %v214 = vld [vmem:[%s1 + $0xc] sm:$0xf]
      %v215 = vld [vmem:[%s1 + $0x10] sm:$0xf]
      %v216 = vld [vmem:[%s1 + $0x14] sm:$0xf]
      %v217 = vld [vmem:[%s1 + $0x18] sm:$0xf]
      %v218 = vld [vmem:[%s1 + $0x1c] sm:$0xf]
      %v219 = vld [vmem:[%s198] sm:$0xff]
      %v220 = vld [vmem:[%s198 + $0x8] sm:$0xff]
      %v221 = vld [vmem:[%s198 + $0x10] sm:$0xff]
      %v222 = vld [vmem:[%s198 + $0x18] sm:$0x33]
      %v223 = vld [vmem:[%s2] sm:$0xff]
      %v224 = vld [vmem:[%s2 + $0x8] sm:$0xff]
      %v225 = vld [vmem:[%s2 + $0x10] sm:$0xff]
      %v226 = vld [vmem:[%s2 + $0x18] sm:$0xff]
      %v227 = vld [vmem:[%s2 + $0x20] sm:$0xff]
      %v228 = vld [vmem:[%s2 + $0x28] sm:$0xff]
      %v229 = vld [vmem:[%s2 + $0x30] sm:$0xff]
      %v230 = vld [vmem:[%s2 + $0x38] sm:$0xff]
      %232 = vset.pattern.permute.xlu0 0
      %233 = vperm.xlu0 %232, %v223
      %v234 = vpop.permute.xlu0 %233
      %237 = vset.pattern.permute.xlu0 0
      %238 = vperm.xlu0 %237, %v224
      %v239 = vpop.permute.xlu0 %238
      %242 = vset.pattern.permute.xlu0 0
      %243 = vperm.xlu0 %242, %v225
      %v244 = vpop.permute.xlu0 %243
      %247 = vset.pattern.permute.xlu0 0
      %248 = vperm.xlu0 %247, %v226
      %v249 = vpop.permute.xlu0 %248
      %252 = vset.pattern.permute.xlu0 0
      %253 = vperm.xlu0 %252, %v227
      %v254 = vpop.permute.xlu0 %253
      %257 = vset.pattern.permute.xlu0 0
      %258 = vperm.xlu0 %257, %v228
      %v259 = vpop.permute.xlu0 %258
      %262 = vset.pattern.permute.xlu0 0
      %263 = vperm.xlu0 %262, %v229
      %v264 = vpop.permute.xlu0 %263
      %267 = vset.pattern.permute.xlu0 0
      %268 = vperm.xlu0 %267, %v230
      %v269 = vpop.permute.xlu0 %268
      %v279 = vunpack.c.l.b16 %v211
      %v280 = vunpack.c.l.b16 %v212
      %v281 = vunpack.c.l.b16 %v213
      %v282 = vunpack.c.l.b16 %v214
      %v283 = vunpack.c.l.b16 %v215
      %v284 = vunpack.c.l.b16 %v216
      %v285 = vunpack.c.l.b16 %v217
      %v286 = vunpack.c.l.b16 %v218
      %v287 = vpack.c.b16 %v280, %v279
      %v288 = vpack.c.b16 %v282, %v281
      %v289 = vpack.c.b16 %v284, %v283
      %v290 = vpack.c.b16 %v286, %v285
      %v295 = vunpack.c.l.b16 %v219
      %v296 = vunpack.c.h.b16 %v219
      %v297 = vunpack.c.l.b16 %v220
      %v298 = vunpack.c.h.b16 %v220
      %v299 = vunpack.c.l.b16 %v221
      %v300 = vunpack.c.h.b16 %v221
      %v301 = vunpack.c.l.b16 %v222
      %v302 = vunpack.c.h.b16 %v222
      %v303 = vpack.c.b16 %v297, %v295
      %v304 = vpack.c.b16 %v298, %v296
      %v305 = vpack.c.b16 %v301, %v299
      %v306 = vpack.c.b16 %v302, %v300
      %vm309 = vcmask 220160
      %v311 = vsel %vm309, %v287, 0
      %v314 = vsel %vm309, %v288, 0
      %v317 = vsel %vm309, %v289, 0
      %v320 = vsel %vm309, %v290, 0
      %vm322 = vcmask 1044480
      %vm323 = vcmask 1045504
      %v324 = vsel %vm322, 4294967295, 65535
      %v325 = vsel %vm323, %v324, 0
      %v327 = vand.u32 %v305, %v325
      %v330 = vand.u32 %v306, %v325
      %332 = vmatprep.subr.bf16.mxu0 %v304
      %333 = vmatpush1.bf16.msra.mxu0 %v303
      %334 = vmatprep.subr.bf16.mxu0 %v330
      %335 = vmatpush1.bf16.msra.mxu0 %v327
      %336 = vmatprep.subr.bf16.mxu0 0
      %337 = vmatpush1.bf16.msra.mxu0 0
      %338 = vmatprep.subr.bf16.mxu0 0
      %339 = vmatpush1.bf16.msra.mxu0 0
      %340 = vmatprep.subr.bf16.mxu0 0
      %341 = vmatpush1.bf16.msra.mxu0 0
      %342 = vmatprep.subr.bf16.mxu0 0
      %343 = vmatpush1.bf16.msra.mxu0 0
      %344 = vmatprep.subr.bf16.mxu0 0
      %345 = vmatpush1.bf16.msra.mxu0 0
      %346 = vmatprep.subr.bf16.mxu0 0
      %347 = vmatpush1.bf16.msra.mxu0 0
      %348 = vmatprep.subr.bf16.mxu0 0
      %349 = vmatpush1.bf16.msra.mxu0 0
      %350 = vmatprep.subr.bf16.mxu0 0
      %351 = vmatpush1.bf16.msra.mxu0 0
      %352 = vmatprep.subr.bf16.mxu0 0
      %353 = vmatpush1.bf16.msra.mxu0 0
      %354 = vmatprep.subr.bf16.mxu0 0
      %355 = vmatpush1.bf16.msra.mxu0 0
      %356 = vmatprep.subr.bf16.mxu0 0
      %357 = vmatpush1.bf16.msra.mxu0 0
      %358 = vmatprep.subr.bf16.mxu0 0
      %359 = vmatpush1.bf16.msra.mxu0 0
      %360 = vmatprep.subr.bf16.mxu0 0
      %361 = vmatpush1.bf16.msra.mxu0 0
      %362 = vmatprep.subr.bf16.mxu0 0
      %363 = vmatpush1.bf16.msra.mxu0 0
      %364 = vmatprep.mubr.bf16.mxu0 0
      %365 = vmatmul.mubr.bf16.gmra.mrb[0].mxu0 %v311
      %v366 = vpop.f32.mrb[0].mxu0
      %v367 = vadd.f32 %v234, %v366
      %v368 = vpop.f32.mrb[0].mxu0
      %v369 = vadd.f32 %v234, %v368
      %v370 = vpop.f32.mrb[0].mxu0
      %v371 = vadd.f32 %v239, %v370
      %v372 = vpop.f32.mrb[0].mxu0
      %v373 = vadd.f32 %v239, %v372
      %374 = vmatprep.mubr.bf16.mxu0 0
      %375 = vmatmul.mubr.bf16.gmra.mrb[0].mxu0 %v314
      %v376 = vpop.f32.mrb[0].mxu0
      %v377 = vadd.f32 %v244, %v376
      %v378 = vpop.f32.mrb[0].mxu0
      %v379 = vadd.f32 %v244, %v378
      %v380 = vpop.f32.mrb[0].mxu0
      %v381 = vadd.f32 %v249, %v380
      %v382 = vpop.f32.mrb[0].mxu0
      %v383 = vadd.f32 %v249, %v382
      %384 = vmatprep.mubr.bf16.mxu0 0
      %385 = vmatmul.mubr.bf16.gmra.mrb[0].mxu0 %v317
      %v386 = vpop.f32.mrb[0].mxu0
      %v387 = vadd.f32 %v254, %v386
      %v388 = vpop.f32.mrb[0].mxu0
      %v389 = vadd.f32 %v254, %v388
      %v390 = vpop.f32.mrb[0].mxu0
      %v391 = vadd.f32 %v259, %v390
      %v392 = vpop.f32.mrb[0].mxu0
      %v393 = vadd.f32 %v259, %v392
      %394 = vmatprep.mubr.bf16.mxu0 0
      %395 = vmatmul.mubr.bf16.gmra.mrb[0].mxu0 %v320
      %v396 = vpop.f32.mrb[0].mxu0
      %v397 = vadd.f32 %v264, %v396
      %v398 = vpop.f32.mrb[0].mxu0
      %v399 = vadd.f32 %v264, %v398
      %v400 = vpop.f32.mrb[0].mxu0
      %v401 = vadd.f32 %v269, %v400
      %v402 = vpop.f32.mrb[0].mxu0
      %v403 = vadd.f32 %v269, %v402
      %404 = vdwg.mxu0
      %v405 = vmax.f32 %v367, 0.0
      %v406 = vmax.f32 %v369, 0.0
      %v407 = vmax.f32 %v371, 0.0
      %v408 = vmax.f32 %v373, 0.0
      %v409 = vmax.f32 %v377, 0.0
      %v410 = vmax.f32 %v379, 0.0
      %v411 = vmax.f32 %v381, 0.0
      %v412 = vmax.f32 %v383, 0.0
      %v413 = vmax.f32 %v387, 0.0
      %v414 = vmax.f32 %v389, 0.0
      %v415 = vmax.f32 %v391, 0.0
      %v416 = vmax.f32 %v393, 0.0
      %v417 = vmax.f32 %v397, 0.0
      %v418 = vmax.f32 %v399, 0.0
      %v419 = vmax.f32 %v401, 0.0
      %v420 = vmax.f32 %v403, 0.0
      %421 = vst [vmem:[%s208] sm:$0xff] %v405
      %422 = vst [vmem:[%s208 + $0x8] sm:$0xff] %v406
      %423 = vst [vmem:[%s208 + $0x10] sm:$0xff] %v407
      %424 = vst [vmem:[%s208 + $0x18] sm:$0xff] %v408
      %425 = vst [vmem:[%s208 + $0x20] sm:$0xff] %v409
      %426 = vst [vmem:[%s208 + $0x28] sm:$0xff] %v410
      %427 = vst [vmem:[%s208 + $0x30] sm:$0xff] %v411
      %428 = vst [vmem:[%s208 + $0x38] sm:$0xff] %v412
      %429 = vst [vmem:[%s208 + $0x40] sm:$0xff] %v413
      %430 = vst [vmem:[%s208 + $0x48] sm:$0xff] %v414
      %431 = vst [vmem:[%s208 + $0x50] sm:$0xff] %v415
      %432 = vst [vmem:[%s208 + $0x58] sm:$0xff] %v416
      %433 = vst [vmem:[%s208 + $0x60] sm:$0xff] %v417
      %434 = vst [vmem:[%s208 + $0x68] sm:$0xff] %v418
      %435 = vst [vmem:[%s208 + $0x70] sm:$0xff] %v419
      %436 = vst [vmem:[%s208 + $0x78] sm:$0xff] %v420
      %s437 = smul.u32 2, %s19
      %p438 = scmp.lt.s32.totalorder %s18, 1
      %s439 = scalar_select %p438, %s18, 1
      %p440 = scmp.lt.s32.totalorder %s437, 1
      %s441 = scalar_select %p440, %s437, 1
      %s442 = smul.addr %s439, 16
      %s443 = sadd.s32 %s441, %s442
      %s444 = smul.addr %s443, 8
      %s445 = scalar_lea.vmem %s3, %s444
      // Predicated region
      $region33: #{style_sam_forward.1} parent=31 // pred_check
        %p446 = pneg %p116
      $region34: #{style_sam_forward.1} parent=31 // pred_check_branch
        %448 = sbr.rel (%p446) target = $region36
      $region35: #{style_sam_forward.1} parent=31 // pred_region
        %s449 = smul.u32 2, %s19
      $region36: #{style_sam_forward.1} parent=31 // pred_fallthru
        _
    $region32: #{style_sam_forward.1} parent=5 // pred_fallthru
      _
    %p450 = scmp.le.s32.totalorder 2, %s9
    // Predicated region
    $region37: #{style_sam_forward.1} parent=5 // pred_check
      %p451 = pneg %p450
    $region38: #{style_sam_forward.1} parent=5 // pred_check_branch
      %453 = sbr.rel (%p451) target = $region40
    $region39: #{style_sam_forward.1} parent=5 // pred_region
      %s454 = ssub.s32 %s9, 2
      // Predicated region
      $region41: #{style_sam_forward.1} parent=39 // pred_check
        %p455 = pneg %p122
      $region42: #{style_sam_forward.1} parent=39 // pred_check_branch
        %457 = sbr.rel (%p455) target = $region44
      $region43: #{style_sam_forward.1} parent=39 // pred_region
        %s458 = smul.u32 2, %s21
        %p459 = scmp.lt.s32.totalorder %s20, 1
        %s460 = scalar_select %p459, %s20, 1
        %p461 = scmp.lt.s32.totalorder %s458, 1
        %s462 = scalar_select %p461, %s458, 1
        %s463 = smul.addr %s460, 16
        %s464 = sadd.s32 %s462, %s463
        %s465 = smul.addr %s464, 8
        %s466 = scalar_lea.vmem %s3, %s465
      $region44: #{style_sam_forward.1} parent=39 // pred_fallthru
        _
    $region40: #{style_sam_forward.1} parent=5 // pred_fallthru
      _
  $region6: #{style_sam_forward.1} parent=0 // loop_footer
    %s13 = sadd.s32 1, %s9
  $region7: #{style_sam_forward.1} parent=0 // loop_footer_branch
    %8 = sbr.rel target = $region3
  $region8: #{style_sam_forward.1} parent=0 // loop_exit
    _

</llo_original>
